<compile_context>
chip_gen: v7x
topology: tpu7x:2x2x1
jax: 0.10.0
libtpu: 0.0.40
codegen_flags: <defaults>
</compile_context>

<pallas_src>
import functools

import jax
import jax.numpy as jnp
import numpy as np
from jax import lax
from jax.experimental import pallas as pl
from jax.experimental.pallas import tpu as pltpu


def predinet_kernel(x_ref, wk_ref, wq_ref, weff_ref, bo_ref, mask_ref, out_ref,
                    *, graphs_per_step, graphs_per_chunk, nodes_per_graph,
                    num_heads, key_size):
    Bt = graphs_per_step
    Gc = graphs_per_chunk          # graphs processed per inner-loop iteration
    S = nodes_per_graph
    H = num_heads
    J = 2 * H                      # (bank, head) pairs
    K = key_size
    L = x_ref.shape[-1]
    CS = Gc * S                    # node rows per chunk
    n_chunks = Bt // Gc

    def chunk_body(c, carry):
        row0 = pl.multiple_of(c * CS, CS)
        x_c = x_ref[pl.ds(row0, CS), :]                            # (Gc*S, L)

        # --- global max pool per graph: one sublane (XLU) reduction ---------
        xf_c = jnp.max(x_c.reshape(Gc, S, L), axis=1)              # (Gc, L)

        # --- queries for both banks & all heads: ONE lane-dense matmul ------
        q_rows = jnp.dot(xf_c, wq_ref[...],
                         preferred_element_type=jnp.float32)       # (Gc, J*K)
        # bank-major rows (row j*Gc + g), built once per chunk
        q_c = jnp.concatenate(
            [q_rows[:, j * K:(j + 1) * K] for j in range(J)], axis=0)  # (J*Gc, K)

        # --- keys for every node of the chunk in one matmul ------------------
        keys_c = jnp.dot(x_c, wk_ref[...],
                         preferred_element_type=jnp.float32)       # (Gc*S, K)

        # --- dense block-diagonal attention over the whole chunk -------------
        scores = lax.dot_general(q_c, keys_c, (((1,), (1,)), ((), ())),
                                 preferred_element_type=jnp.float32)  # (J*Gc, Gc*S)
        scores = scores + mask_ref[...]            # -1e30 off the diagonal blocks
        scores = scores - jnp.max(scores, axis=-1, keepdims=True)
        p = jnp.exp(scores)
        att = p / jnp.sum(p, axis=-1, keepdims=True)   # exact softmax (tight parity)

        feat = jnp.dot(att, x_c,
                       preferred_element_type=jnp.float32)         # (J*Gc, L)
        # bank 0 minus bank 1, contiguous sublane slices: row h*Gc + g
        fdiff = feat[:H * Gc] - feat[H * Gc:]                       # (H*Gc, L)

        # --- output projection: (feat0-feat1) @ (We . Wo_head), per head -----
        acc = jnp.dot(fdiff[0:Gc], weff_ref[0],
                      preferred_element_type=jnp.float32)           # (Gc, L)
        for h in range(1, H):
            acc = acc + jnp.dot(fdiff[h * Gc:(h + 1) * Gc], weff_ref[h],
                                preferred_element_type=jnp.float32)
        acc = acc + bo_ref[...]                                     # bias (1, L)
        out = jnp.where(acc >= 0, acc, 0.01 * acc)                  # LeakyReLU
        out_ref[pl.ds(pl.multiple_of(c * Gc, Gc), Gc), :] = out
        return carry

    lax.fori_loop(0, n_chunks, chunk_body, 0)


def predinet_forward(inp, batch_ids, params, *, num_heads, key_size, relations,
                     graphs_per_step=64, graphs_per_chunk=8):
    L = inp.shape[-1]
    ids = np.asarray(batch_ids)
    B = int(len(np.unique(ids)))
    N = inp.shape[0]
    # same contiguity / equal-size assumption as the reference's reshape(B,-1,L)
    assert np.all(np.diff(ids) >= 0), "batch_ids must be sorted (contiguous graphs)"
    assert N % B == 0, "equal node count per graph required"
    S = N // B
    assert np.all(np.bincount(ids, minlength=B) == S), "equal node count per graph required"

    H, K, R = num_heads, key_size, relations
    J = 2 * H
    Gc = graphs_per_chunk
    Bt = max(Gc, (graphs_per_step // Gc) * Gc)      # multiple of the chunk size
    B_pad = ((B + Bt - 1) // Bt) * Bt

    x2d = inp.astype(jnp.float32)
    if B_pad != B:                                   # pad with zero graphs
        x2d = jnp.concatenate(
            [x2d, jnp.zeros(((B_pad - B) * S, L), jnp.float32)], axis=0)

    # Wrapper-side weight re-layout / fusion:
    #   wq_cat: both query banks concatenated along the output dim -> (L, 2H*K)
    #   weff_h = We^T @ Wo[:, hR:(h+1)R]^T  (embed_entities fused into output)
    wk = params["wk"].T.astype(jnp.float32)                                # (L, K)
    wq_cat = jnp.concatenate([params["wq0"].T, params["wq1"].T],
                             axis=1).astype(jnp.float32)                   # (L, J*K)
    wo_r = params["wo"].reshape(L, H, R)                                   # (L, H, R)
    weff = jnp.einsum('rl,mhr->hlm', params["we"], wo_r).astype(jnp.float32)  # (H, L, L)
    bo = params["bo"].reshape(1, L).astype(jnp.float32)

    # Additive softmax mask: row j*Gc+g may only attend to columns of graph g.
    g_row = np.arange(J * Gc) % Gc
    g_col = np.arange(Gc * S) // S
    maskbias = jnp.asarray(
        np.where(g_row[:, None] == g_col[None, :], 0.0, -1e30), dtype=jnp.float32)

    kernel = functools.partial(
        predinet_kernel, graphs_per_step=Bt, graphs_per_chunk=Gc,
        nodes_per_graph=S, num_heads=H, key_size=K)

    out = pl.pallas_call(
        kernel,
        out_shape=jax.ShapeDtypeStruct((B_pad, L), jnp.float32),
        grid_spec=pltpu.PrefetchScalarGridSpec(
            num_scalar_prefetch=0,
            grid=(B_pad // Bt,),
            in_specs=[
                pl.BlockSpec((Bt * S, L), lambda i: (i, 0)),      # node features
                pl.BlockSpec((L, K), lambda i: (0, 0)),           # key weights
                pl.BlockSpec((L, J * K), lambda i: (0, 0)),       # fused query weights
                pl.BlockSpec((H, L, L), lambda i: (0, 0, 0)),     # fused We*Wo per head
                pl.BlockSpec((1, L), lambda i: (0, 0)),           # output bias
                pl.BlockSpec((J * Gc, Gc * S), lambda i: (0, 0)), # softmax block mask
            ],
            out_specs=pl.BlockSpec((Bt, L), lambda i: (i, 0)),
        ),
        compiler_params=pltpu.CompilerParams(dimension_semantics=("parallel",)),
    )(x2d, wk, wq_cat, weff, bo, maskbias)
    return out[:B]


def predinet_reference(inp, batch_ids, params, *, num_heads, key_size, relations):
    """Pure-JAX mirror of the PyTorch forward (for verification)."""
    latent_dim = inp.shape[-1]
    B = int(len(np.unique(np.asarray(batch_ids))))
    S = inp.shape[0] // B
    x = inp.reshape(B, S, latent_dim)
    inp_flatten = jnp.max(x, axis=1)                                     # global_max_pool
    keys = x @ params["wk"].T                                            # (B, S, K)
    keys_T = jnp.transpose(
        jnp.broadcast_to(keys[:, None], (B, num_heads, S, key_size)), (0, 1, 3, 2))
    inp_tiled = jnp.broadcast_to(x[:, None], (B, num_heads, S, latent_dim))
    embs = []
    for w in (params["wq0"], params["wq1"]):
        q = (inp_flatten @ w.T).reshape(B, num_heads, key_size)[:, :, None, :]
        qk = q @ keys_T                                                  # (B, H, 1, S)
        att = jax.nn.softmax(qk, axis=-1)
        feat = jnp.squeeze(att @ inp_tiled, 2)                           # (B, H, L)
        embs.append(feat @ params["we"].T)                               # (B, H, R)
    dx = (embs[0] - embs[1]).reshape(B, -1)
    out = dx @ params["wo"].T + params["bo"]
    return jnp.where(out >= 0, out, 0.01 * out)


def init_params(key, latent_dim, num_heads, key_size, relations):
    """Deterministic init mimicking torch.nn.Linear's U(-1/sqrt(fan_in), ..)."""
    ks = jax.random.split(key, 6)

    def lin(k, out_f, in_f):
        bound = 1.0 / np.sqrt(in_f)
        return jax.random.uniform(k, (out_f, in_f), jnp.float32, -bound, bound)

    bound_o = 1.0 / np.sqrt(num_heads * relations)
    return {
        "wk": lin(ks[0], key_size, latent_dim),                      # get_keys
        "wq0": lin(ks[1], num_heads * key_size, latent_dim),         # get_Q[0]
        "wq1": lin(ks[2], num_heads * key_size, latent_dim),         # get_Q[1]
        "we": lin(ks[3], relations, latent_dim),                     # embed_entities
        "wo": lin(ks[4], latent_dim, num_heads * relations),         # output linear
        "bo": jax.random.uniform(ks[5], (latent_dim,), jnp.float32,
                                 -bound_o, bound_o),                 # output bias
    }


if __name__ == "__main__":
    latent_dim, num_heads, key_size, relations = 32, 4, 16, 8
    B, S = 100, 8     # 100 graphs of 8 nodes -> padded to 128 graphs, 2 grid steps of 64

    key = jax.random.PRNGKey(0)
    k_inp, k_par = jax.random.split(key)
    inp = jax.random.normal(k_inp, (B * S, latent_dim), jnp.float32)
    batch_ids = jnp.repeat(jnp.arange(B, dtype=jnp.int32), S)
    params = init_params(k_par, latent_dim, num_heads, key_size, relations)

    out = predinet_forward(inp, batch_ids, params,
                           num_heads=num_heads, key_size=key_size,
                           relations=relations)
    out = jax.block_until_ready(out)

    ref = predinet_reference(inp, batch_ids, params,
                             num_heads=num_heads, key_size=key_size,
                             relations=relations)
    assert out.shape == (B, latent_dim)
    # exact softmax divide; only the wrapper-side We.Wo fusion reorders fp ops
    assert jnp.allclose(out, ref, rtol=5e-4, atol=5e-4), "mismatch vs JAX reference"

    print("KERNEL_OK")
</pallas_src>

<mosaic_0001>
module attributes {stable_mosaic.version = 11 : i64} {
  func.func @predinet_kernel(%arg0: i32, %arg1: memref<512x32xf32, #tpu.memory_space<vmem>>, %arg2: memref<32x16xf32, #tpu.memory_space<vmem>>, %arg3: memref<32x128xf32, #tpu.memory_space<vmem>>, %arg4: memref<4x32x32xf32, #tpu.memory_space<vmem>>, %arg5: memref<1x32xf32, #tpu.memory_space<vmem>>, %arg6: memref<64x64xf32, #tpu.memory_space<vmem>>, %arg7: memref<64x32xf32, #tpu.memory_space<vmem>>) attributes {dimension_semantics = [#tpu.dimension_semantics<parallel>], iteration_bounds = array<i64: 2>, scalar_prefetch = 0 : i64, scratch_operands = 0 : i64, tpu.core_type = #tpu.core_type<tc>, window_params = [{transform_indices = @transform_0, window_bounds = array<i64: 512, 32>}, {pipeline_mode = #tpu.pipeline_mode<synchronous>, transform_indices = @transform_1, window_bounds = array<i64: 32, 16>}, {pipeline_mode = #tpu.pipeline_mode<synchronous>, transform_indices = @transform_2, window_bounds = array<i64: 32, 128>}, {pipeline_mode = #tpu.pipeline_mode<synchronous>, transform_indices = @transform_3, window_bounds = array<i64: 4, 32, 32>}, {pipeline_mode = #tpu.pipeline_mode<synchronous>, transform_indices = @transform_4, window_bounds = array<i64: 1, 32>}, {pipeline_mode = #tpu.pipeline_mode<synchronous>, transform_indices = @transform_5, window_bounds = array<i64: 64, 64>}, {transform_indices = @transform_6, window_bounds = array<i64: 64, 32>}]} {
    %c0_i32 = arith.constant 0 : i32
    %c8_i32 = arith.constant 8 : i32
    %0 = arith.addi %c0_i32, %c8_i32 : i32
    %c1_i32 = arith.constant 1 : i32
    scf.for %arg8 = %c0_i32 to %0 step %c1_i32  : i32 {
      %c64_i32 = arith.constant 64 : i32
      %1 = arith.muli %arg8, %c64_i32 : i32
      %2 = tpu.assume_multiple %1, 64 : i32
      %3 = arith.index_cast %2 : i32 to index
      %c0 = arith.constant 0 : index
      %4 = vector.load %arg1[%3, %c0] : memref<512x32xf32, #tpu.memory_space<vmem>>, vector<64x32xf32>
      %5 = vector.shape_cast %4 : vector<64x32xf32> to vector<8x8x32xf32>
      %cst = arith.constant dense<0xFF800000> : vector<8x32xf32>
      %6 = vector.multi_reduction <maximumf>, %5, %cst [1] : vector<8x8x32xf32> to vector<8x32xf32>
      %c0_1 = arith.constant 0 : index
      %c0_2 = arith.constant 0 : index
      %7 = vector.load %arg3[%c0_1, %c0_2] : memref<32x128xf32, #tpu.memory_space<vmem>>, vector<32x128xf32>
      %cst_3 = arith.constant dense<0.000000e+00> : vector<8x128xf32>
      %8 = tpu.matmul %6, %7, %cst_3 {dimension_numbers = #tpu.dot_dimension_numbers<[1], [0], [0], [1], [0, 0, 1, 1], [], []>} : vector<8x32xf32>, vector<32x128xf32>, vector<8x128xf32> -> vector<8x128xf32>
      %9 = vector.extract_strided_slice %8 {offsets = [0, 0], sizes = [8, 16], strides = [1, 1]} : vector<8x128xf32> to vector<8x16xf32>
      %10 = vector.extract_strided_slice %8 {offsets = [0, 16], sizes = [8, 16], strides = [1, 1]} : vector<8x128xf32> to vector<8x16xf32>
      %11 = vector.extract_strided_slice %8 {offsets = [0, 32], sizes = [8, 16], strides = [1, 1]} : vector<8x128xf32> to vector<8x16xf32>
      %12 = vector.extract_strided_slice %8 {offsets = [0, 48], sizes = [8, 16], strides = [1, 1]} : vector<8x128xf32> to vector<8x16xf32>
      %13 = vector.extract_strided_slice %8 {offsets = [0, 64], sizes = [8, 16], strides = [1, 1]} : vector<8x128xf32> to vector<8x16xf32>
      %14 = vector.extract_strided_slice %8 {offsets = [0, 80], sizes = [8, 16], strides = [1, 1]} : vector<8x128xf32> to vector<8x16xf32>
      %15 = vector.extract_strided_slice %8 {offsets = [0, 96], sizes = [8, 16], strides = [1, 1]} : vector<8x128xf32> to vector<8x16xf32>
      %16 = vector.extract_strided_slice %8 {offsets = [0, 112], sizes = [8, 16], strides = [1, 1]} : vector<8x128xf32> to vector<8x16xf32>
      %17 = tpu.concatenate %9, %10, %11, %12, %13, %14, %15, %16 in 0 : vector<8x16xf32>, vector<8x16xf32>, vector<8x16xf32>, vector<8x16xf32>, vector<8x16xf32>, vector<8x16xf32>, vector<8x16xf32>, vector<8x16xf32> -> vector<64x16xf32>
      %c0_4 = arith.constant 0 : index
      %c0_5 = arith.constant 0 : index
      %18 = vector.load %arg2[%c0_4, %c0_5] : memref<32x16xf32, #tpu.memory_space<vmem>>, vector<32x16xf32>
      %cst_6 = arith.constant dense<0.000000e+00> : vector<64x16xf32>
      %19 = tpu.matmul %4, %18, %cst_6 {dimension_numbers = #tpu.dot_dimension_numbers<[1], [0], [0], [1], [0, 0, 1, 1], [], []>} : vector<64x32xf32>, vector<32x16xf32>, vector<64x16xf32> -> vector<64x16xf32>
      %cst_7 = arith.constant dense<0.000000e+00> : vector<64x64xf32>
      %20 = tpu.matmul %17, %19, %cst_7 {dimension_numbers = #tpu.dot_dimension_numbers<[1], [1], [0], [0], [0, 0, 1, 0], [], []>} : vector<64x16xf32>, vector<64x16xf32>, vector<64x64xf32> -> vector<64x64xf32>
      %c0_8 = arith.constant 0 : index
      %c0_9 = arith.constant 0 : index
      %21 = vector.load %arg6[%c0_8, %c0_9] : memref<64x64xf32, #tpu.memory_space<vmem>>, vector<64x64xf32>
      %22 = arith.addf %20, %21 : vector<64x64xf32>
      %cst_10 = arith.constant dense<0xFF800000> : vector<64xf32>
      %23 = vector.multi_reduction <maximumf>, %22, %cst_10 [1] : vector<64x64xf32> to vector<64xf32>
      %24 = vector.shape_cast %23 : vector<64xf32> to vector<64x1xf32>
      %25 = vector.broadcast %24 : vector<64x1xf32> to vector<64x64xf32>
      %26 = arith.subf %22, %25 : vector<64x64xf32>
      %27 = math.exp %26 : vector<64x64xf32>
      %cst_11 = arith.constant dense<0.000000e+00> : vector<64xf32>
      %28 = vector.multi_reduction <add>, %27, %cst_11 [1] : vector<64x64xf32> to vector<64xf32>
      %29 = vector.shape_cast %28 : vector<64xf32> to vector<64x1xf32>
      %30 = vector.broadcast %29 : vector<64x1xf32> to vector<64x64xf32>
      %31 = arith.divf %27, %30 : vector<64x64xf32>
      %cst_12 = arith.constant dense<0.000000e+00> : vector<64x32xf32>
      %32 = tpu.matmul %31, %4, %cst_12 {dimension_numbers = #tpu.dot_dimension_numbers<[1], [0], [0], [1], [0, 0, 1, 1], [], []>} : vector<64x64xf32>, vector<64x32xf32>, vector<64x32xf32> -> vector<64x32xf32>
      %33 = vector.extract_strided_slice %32 {offsets = [0, 0], sizes = [32, 32], strides = [1, 1]} : vector<64x32xf32> to vector<32x32xf32>
      %34 = vector.extract_strided_slice %32 {offsets = [32, 0], sizes = [32, 32], strides = [1, 1]} : vector<64x32xf32> to vector<32x32xf32>
      %35 = arith.subf %33, %34 : vector<32x32xf32>
      %36 = vector.extract_strided_slice %35 {offsets = [0, 0], sizes = [8, 32], strides = [1, 1]} : vector<32x32xf32> to vector<8x32xf32>
      %c0_13 = arith.constant 0 : index
      %c0_14 = arith.constant 0 : index
      %c0_15 = arith.constant 0 : index
      %37 = vector.load %arg4[%c0_13, %c0_14, %c0_15] : memref<4x32x32xf32, #tpu.memory_space<vmem>>, vector<1x32x32xf32>
      %38 = vector.shape_cast %37 : vector<1x32x32xf32> to vector<32x32xf32>
      %cst_16 = arith.constant dense<0.000000e+00> : vector<8x32xf32>
      %39 = tpu.matmul %36, %38, %cst_16 {dimension_numbers = #tpu.dot_dimension_numbers<[1], [0], [0], [1], [0, 0, 1, 1], [], []>} : vector<8x32xf32>, vector<32x32xf32>, vector<8x32xf32> -> vector<8x32xf32>
      %40 = vector.extract_strided_slice %35 {offsets = [8, 0], sizes = [8, 32], strides = [1, 1]} : vector<32x32xf32> to vector<8x32xf32>
      %c1 = arith.constant 1 : index
      %c0_17 = arith.constant 0 : index
      %c0_18 = arith.constant 0 : index
      %41 = vector.load %arg4[%c1, %c0_17, %c0_18] : memref<4x32x32xf32, #tpu.memory_space<vmem>>, vector<1x32x32xf32>
      %42 = vector.shape_cast %41 : vector<1x32x32xf32> to vector<32x32xf32>
      %cst_19 = arith.constant dense<0.000000e+00> : vector<8x32xf32>
      %43 = tpu.matmul %40, %42, %cst_19 {dimension_numbers = #tpu.dot_dimension_numbers<[1], [0], [0], [1], [0, 0, 1, 1], [], []>} : vector<8x32xf32>, vector<32x32xf32>, vector<8x32xf32> -> vector<8x32xf32>
      %44 = arith.addf %39, %43 : vector<8x32xf32>
      %45 = vector.extract_strided_slice %35 {offsets = [16, 0], sizes = [8, 32], strides = [1, 1]} : vector<32x32xf32> to vector<8x32xf32>
      %c2 = arith.constant 2 : index
      %c0_20 = arith.constant 0 : index
      %c0_21 = arith.constant 0 : index
      %46 = vector.load %arg4[%c2, %c0_20, %c0_21] : memref<4x32x32xf32, #tpu.memory_space<vmem>>, vector<1x32x32xf32>
      %47 = vector.shape_cast %46 : vector<1x32x32xf32> to vector<32x32xf32>
      %cst_22 = arith.constant dense<0.000000e+00> : vector<8x32xf32>
      %48 = tpu.matmul %45, %47, %cst_22 {dimension_numbers = #tpu.dot_dimension_numbers<[1], [0], [0], [1], [0, 0, 1, 1], [], []>} : vector<8x32xf32>, vector<32x32xf32>, vector<8x32xf32> -> vector<8x32xf32>
      %49 = arith.addf %44, %48 : vector<8x32xf32>
      %50 = vector.extract_strided_slice %35 {offsets = [24, 0], sizes = [8, 32], strides = [1, 1]} : vector<32x32xf32> to vector<8x32xf32>
      %c3 = arith.constant 3 : index
      %c0_23 = arith.constant 0 : index
      %c0_24 = arith.constant 0 : index
      %51 = vector.load %arg4[%c3, %c0_23, %c0_24] : memref<4x32x32xf32, #tpu.memory_space<vmem>>, vector<1x32x32xf32>
      %52 = vector.shape_cast %51 : vector<1x32x32xf32> to vector<32x32xf32>
      %cst_25 = arith.constant dense<0.000000e+00> : vector<8x32xf32>
      %53 = tpu.matmul %50, %52, %cst_25 {dimension_numbers = #tpu.dot_dimension_numbers<[1], [0], [0], [1], [0, 0, 1, 1], [], []>} : vector<8x32xf32>, vector<32x32xf32>, vector<8x32xf32> -> vector<8x32xf32>
      %54 = arith.addf %49, %53 : vector<8x32xf32>
      %c0_26 = arith.constant 0 : index
      %c0_27 = arith.constant 0 : index
      %55 = vector.load %arg5[%c0_26, %c0_27] : memref<1x32xf32, #tpu.memory_space<vmem>>, vector<1x32xf32>
      %56 = vector.broadcast %55 : vector<1x32xf32> to vector<8x32xf32>
      %57 = arith.addf %54, %56 : vector<8x32xf32>
      %cst_28 = arith.constant 0.000000e+00 : f32
      %58 = vector.broadcast %cst_28 : f32 to vector<8x32xf32>
      %59 = arith.cmpf oge, %57, %58 : vector<8x32xf32>
      %cst_29 = arith.constant 0.00999999977 : f32
      %60 = vector.broadcast %cst_29 : f32 to vector<8x32xf32>
      %61 = arith.mulf %60, %57 : vector<8x32xf32>
      %62 = arith.select %59, %57, %61 : vector<8x32xi1>, vector<8x32xf32>
      %c8_i32_30 = arith.constant 8 : i32
      %63 = arith.muli %arg8, %c8_i32_30 : i32
      %64 = tpu.assume_multiple %63, 8 : i32
      %65 = arith.index_cast %64 : i32 to index
      %c0_31 = arith.constant 0 : index
      %66 = vector.load %arg7[%65, %c0_31] : memref<64x32xf32, #tpu.memory_space<vmem>>, vector<8x32xf32>
      tpu.vector_store %arg7[%65, %c0_31], %62 {strides = array<i32>} : memref<64x32xf32, #tpu.memory_space<vmem>>, vector<8x32xf32>,
    }
    %c8_i32_0 = arith.constant 8 : i32
    return
  }
  func.func @transform_0(%arg0: i32) -> (i32, i32) {
    %c0_i32 = arith.constant 0 : i32
    %c0_i32_0 = arith.constant 0 : i32
    return %arg0, %c0_i32 : i32, i32
  }
  func.func @transform_1(%arg0: i32) -> (i32, i32) {
    %c0_i32 = arith.constant 0 : i32
    %c0_i32_0 = arith.constant 0 : i32
    %c0_i32_1 = arith.constant 0 : i32
    return %c0_i32, %c0_i32_0 : i32, i32
  }
  func.func @transform_2(%arg0: i32) -> (i32, i32) {
    %c0_i32 = arith.constant 0 : i32
    %c0_i32_0 = arith.constant 0 : i32
    %c0_i32_1 = arith.constant 0 : i32
    return %c0_i32, %c0_i32_0 : i32, i32
  }
  func.func @transform_3(%arg0: i32) -> (i32, i32, i32) {
    %c0_i32 = arith.constant 0 : i32
    %c0_i32_0 = arith.constant 0 : i32
    %c0_i32_1 = arith.constant 0 : i32
    %c0_i32_2 = arith.constant 0 : i32
    return %c0_i32, %c0_i32_0, %c0_i32_1 : i32, i32, i32
  }
  func.func @transform_4(%arg0: i32) -> (i32, i32) {
    %c0_i32 = arith.constant 0 : i32
    %c0_i32_0 = arith.constant 0 : i32
    %c0_i32_1 = arith.constant 0 : i32
    return %c0_i32, %c0_i32_0 : i32, i32
  }
  func.func @transform_5(%arg0: i32) -> (i32, i32) {
    %c0_i32 = arith.constant 0 : i32
    %c0_i32_0 = arith.constant 0 : i32
    %c0_i32_1 = arith.constant 0 : i32
    return %c0_i32, %c0_i32_0 : i32, i32
  }
  func.func @transform_6(%arg0: i32) -> (i32, i32) {
    %c0_i32 = arith.constant 0 : i32
    %c0_i32_0 = arith.constant 0 : i32
    return %arg0, %c0_i32 : i32, i32
  }
}

</mosaic_0001>

<llo_original>
// kernel: tpu_custom_call.1
$region0: #{tpu_custom_call.1}
  #allocation0 [shape = 'u32[]', space=smem, size = 0x4, offset = 0x4, fixed_abs, tag = 'smem constant byte address 0x4 - core index']
  #allocation1 [shape = 'u32[144,128]{1,0:T(1,128)}', space=vmem, size = 0x12000, scoped, tag = 'internal scratch']
  %s0 = inlined_call_operand.vmem [shape: f32[1024,32], index: 0, kind: input, shape index: {}]
  %s1 = inlined_call_operand.vmem [shape: f32[32,16], index: 1, kind: input, shape index: {}]
  %s2 = inlined_call_operand.vmem [shape: f32[32,128], index: 2, kind: input, shape index: {}]
  %s3 = inlined_call_operand.vmem [shape: f32[4,32,32], index: 3, kind: input, shape index: {}]
  %s4 = inlined_call_operand.vmem [shape: f32[1,32], index: 4, kind: input, shape index: {}]
  %s5 = inlined_call_operand.vmem [shape: f32[64,64], index: 5, kind: input, shape index: {}]
  %s6 = inlined_call_operand.vmem [shape: f32[128,32], index: 6, kind: output, shape index: {}]
  %s7 = sld [smem:[#allocation0]]
  $region64: #{tpu_custom_call.1} parent=0
    _
  %s9 = ssub.s32 1, %s7
  %s10 = scalar_select 0, %s9, %s7
  loop: start=0, step=1, limit=4
  $region2: #{tpu_custom_call.1} parent=0 // loop_pre_header
    _
  $region3: #{tpu_custom_call.1} parent=0 // loop_header
    %s12 = sphi 0, %s16
    %p13 = scmp.ge.s32.totalorder %s12, 4
    %s22 = sphi 0, %s24
    %s25 = sphi 0, %s22
    %s26 = sphi 0, %s25
    %s42 = sphi 0, %s26
    %s46 = sphi 0, %s46
    %s48 = sphi 0, %s46
    %s49 = sphi 0, %s48
    %s63 = sphi 0, %s49
    %s67 = sphi 0, %s67
    %s69 = sphi 0, %s67
    %s70 = sphi 0, %s69
    %s84 = sphi 0, %s70
    %s88 = sphi 0, %s88
    %s90 = sphi 0, %s88
    %s91 = sphi 0, %s90
    %s105 = sphi 0, %s91
    %s109 = sphi 0, %s109
    %s111 = sphi 0, %s109
    %s112 = sphi 0, %s111
    %s126 = sphi 0, %s112
    %s130 = sphi 0, %s130
    %s132 = sphi 0, %s130
    %s133 = sphi 0, %s132
    %s147 = sphi 0, %s133
    %s153 = sphi 0, %s155
    %s156 = sphi 0, %s153
    %s157 = sphi 0, %s156
    %s173 = sphi 0, %s157
  $region4: #{tpu_custom_call.1} parent=0 // loop_header_branch
    %15 = sbr.rel (%p13) target = $region8
  $region5: #{tpu_custom_call.1} parent=0 // loop_body
    %s17 = ssub.s32 %s12, 1
    %s18 = ssub.s32 %s12, 2
    %s19 = sadd.s32 %s12, 1
    %s20 = ssub.s32 %s12, %s19
    %p21 = scmp.eq.s32.totalorder %s20, 0
    %s23 = sadd.s32 %s22, 1
    %s24 = scalar_select %p21, %s22, %s23
    %p27 = pneg %p21
    %p28 = scmp.eq.s32.totalorder %s12, 1
    %p29 = por %p27, %p28
    %p30 = scmp.ne.s32.totalorder %s22, %s25
    %p31 = scmp.eq.s32.totalorder %s12, 0
    %p32 = por %p30, %p31
    %p33 = scmp.ne.s32.totalorder %s22, %s25
    %p34 = scmp.eq.s32.totalorder %s17, 1
    %p35 = por %p33, %p34
    %p36 = scmp.ne.s32.totalorder %s25, %s26
    %p37 = scmp.eq.s32.totalorder %s17, 0
    %p38 = por %p36, %p37
    %p39 = scmp.ne.s32.totalorder %s25, %s26
    %p40 = scmp.eq.s32.totalorder %s18, 1
    %p41 = por %p39, %p40
    %p43 = scmp.ne.s32.totalorder %s26, %s42
    %p44 = scmp.eq.s32.totalorder %s18, 0
    %p45 = por %p43, %p44
    %s47 = sadd.s32 %s46, 1
    %p50 = scmp.eq.s32.totalorder %s12, 1
    %p51 = scmp.ne.s32.totalorder %s46, %s48
    %p52 = scmp.eq.s32.totalorder %s12, 0
    %p53 = por %p51, %p52
    %p54 = scmp.ne.s32.totalorder %s46, %s48
    %p55 = scmp.eq.s32.totalorder %s17, 1
    %p56 = por %p54, %p55
    %p57 = scmp.ne.s32.totalorder %s48, %s49
    %p58 = scmp.eq.s32.totalorder %s17, 0
    %p59 = por %p57, %p58
    %p60 = scmp.ne.s32.totalorder %s48, %s49
    %p61 = scmp.eq.s32.totalorder %s18, 1
    %p62 = por %p60, %p61
    %p64 = scmp.ne.s32.totalorder %s49, %s63
    %p65 = scmp.eq.s32.totalorder %s18, 0
    %p66 = por %p64, %p65
    %s68 = sadd.s32 %s67, 1
    %p71 = scmp.eq.s32.totalorder %s12, 1
    %p72 = scmp.ne.s32.totalorder %s67, %s69
    %p73 = scmp.eq.s32.totalorder %s12, 0
    %p74 = por %p72, %p73
    %p75 = scmp.ne.s32.totalorder %s67, %s69
    %p76 = scmp.eq.s32.totalorder %s17, 1
    %p77 = por %p75, %p76
    %p78 = scmp.ne.s32.totalorder %s69, %s70
    %p79 = scmp.eq.s32.totalorder %s17, 0
    %p80 = por %p78, %p79
    %p81 = scmp.ne.s32.totalorder %s69, %s70
    %p82 = scmp.eq.s32.totalorder %s18, 1
    %p83 = por %p81, %p82
    %p85 = scmp.ne.s32.totalorder %s70, %s84
    %p86 = scmp.eq.s32.totalorder %s18, 0
    %p87 = por %p85, %p86
    %s89 = sadd.s32 %s88, 1
    %p92 = scmp.eq.s32.totalorder %s12, 1
    %p93 = scmp.ne.s32.totalorder %s88, %s90
    %p94 = scmp.eq.s32.totalorder %s12, 0
    %p95 = por %p93, %p94
    %p96 = scmp.ne.s32.totalorder %s88, %s90
    %p97 = scmp.eq.s32.totalorder %s17, 1
    %p98 = por %p96, %p97
    %p99 = scmp.ne.s32.totalorder %s90, %s91
    %p100 = scmp.eq.s32.totalorder %s17, 0
    %p101 = por %p99, %p100
    %p102 = scmp.ne.s32.totalorder %s90, %s91
    %p103 = scmp.eq.s32.totalorder %s18, 1
    %p104 = por %p102, %p103
    %p106 = scmp.ne.s32.totalorder %s91, %s105
    %p107 = scmp.eq.s32.totalorder %s18, 0
    %p108 = por %p106, %p107
    %s110 = sadd.s32 %s109, 1
    %p113 = scmp.eq.s32.totalorder %s12, 1
    %p114 = scmp.ne.s32.totalorder %s109, %s111
    %p115 = scmp.eq.s32.totalorder %s12, 0
    %p116 = por %p114, %p115
    %p117 = scmp.ne.s32.totalorder %s109, %s111
    %p118 = scmp.eq.s32.totalorder %s17, 1
    %p119 = por %p117, %p118
    %p120 = scmp.ne.s32.totalorder %s111, %s112
    %p121 = scmp.eq.s32.totalorder %s17, 0
    %p122 = por %p120, %p121
    %p123 = scmp.ne.s32.totalorder %s111, %s112
    %p124 = scmp.eq.s32.totalorder %s18, 1
    %p125 = por %p123, %p124
    %p127 = scmp.ne.s32.totalorder %s112, %s126
    %p128 = scmp.eq.s32.totalorder %s18, 0
    %p129 = por %p127, %p128
    %s131 = sadd.s32 %s130, 1
    %p134 = scmp.eq.s32.totalorder %s12, 1
    %p135 = scmp.ne.s32.totalorder %s130, %s132
    %p136 = scmp.eq.s32.totalorder %s12, 0
    %p137 = por %p135, %p136
    %p138 = scmp.ne.s32.totalorder %s130, %s132
    %p139 = scmp.eq.s32.totalorder %s17, 1
    %p140 = por %p138, %p139
    %p141 = scmp.ne.s32.totalorder %s132, %s133
    %p142 = scmp.eq.s32.totalorder %s17, 0
    %p143 = por %p141, %p142
    %p144 = scmp.ne.s32.totalorder %s132, %s133
    %p145 = scmp.eq.s32.totalorder %s18, 1
    %p146 = por %p144, %p145
    %p148 = scmp.ne.s32.totalorder %s133, %s147
    %p149 = scmp.eq.s32.totalorder %s18, 0
    %p150 = por %p148, %p149
    %s151 = ssub.s32 %s12, %s19
    %p152 = scmp.eq.s32.totalorder %s151, 0
    %s154 = sadd.s32 %s153, 1
    %s155 = scalar_select %p152, %s153, %s154
    %p158 = pneg %p152
    %p159 = scmp.eq.s32.totalorder %s12, 1
    %p160 = por %p158, %p159
    %p161 = scmp.ne.s32.totalorder %s153, %s156
    %p162 = scmp.eq.s32.totalorder %s12, 0
    %p163 = por %p161, %p162
    %p164 = scmp.ne.s32.totalorder %s153, %s156
    %p165 = scmp.eq.s32.totalorder %s17, 1
    %p166 = por %p164, %p165
    %p167 = scmp.ne.s32.totalorder %s156, %s157
    %p168 = scmp.eq.s32.totalorder %s17, 0
    %p169 = por %p167, %p168
    %p170 = scmp.ne.s32.totalorder %s156, %s157
    %p171 = scmp.eq.s32.totalorder %s18, 1
    %p172 = por %p170, %p171
    %p174 = scmp.ne.s32.totalorder %s157, %s173
    %p175 = scmp.eq.s32.totalorder %s18, 0
    %p176 = por %p174, %p175
    %p177 = scmp.le.s32.totalorder 1, %s12
    %p178 = scmp.lt.s32.totalorder %s12, 3
    %p179 = pnand %p177, %p178
    %p180 = pneg %p179
    // Predicated region
    $region9: #{tpu_custom_call.1} parent=5 // pred_check
      _
    $region10: #{tpu_custom_call.1} parent=5 // pred_check_branch
      %182 = sbr.rel (%p179) target = $region12
    $region11: #{tpu_custom_call.1} parent=5 // pred_region
      %s183 = ssub.s32 %s12, 1
      // Predicated region
      $region13: #{tpu_custom_call.1} parent=11 // pred_check
        %p184 = pneg %p59
      $region14: #{tpu_custom_call.1} parent=11 // pred_check_branch
        %186 = sbr.rel (%p184) target = $region16
      $region15: #{tpu_custom_call.1} parent=11 // pred_region
        _
      $region16: #{tpu_custom_call.1} parent=11 // pred_fallthru
        _
      // Predicated region
      $region17: #{tpu_custom_call.1} parent=11 // pred_check
        %p187 = pneg %p80
      $region18: #{tpu_custom_call.1} parent=11 // pred_check_branch
        %189 = sbr.rel (%p187) target = $region20
      $region19: #{tpu_custom_call.1} parent=11 // pred_region
        _
      $region20: #{tpu_custom_call.1} parent=11 // pred_fallthru
        _
      // Predicated region
      $region21: #{tpu_custom_call.1} parent=11 // pred_check
        %p190 = pneg %p101
      $region22: #{tpu_custom_call.1} parent=11 // pred_check_branch
        %192 = sbr.rel (%p190) target = $region24
      $region23: #{tpu_custom_call.1} parent=11 // pred_region
        _
      $region24: #{tpu_custom_call.1} parent=11 // pred_fallthru
        _
      // Predicated region
      $region25: #{tpu_custom_call.1} parent=11 // pred_check
        %p193 = pneg %p122
      $region26: #{tpu_custom_call.1} parent=11 // pred_check_branch
        %195 = sbr.rel (%p193) target = $region28
      $region27: #{tpu_custom_call.1} parent=11 // pred_region
        _
      $region28: #{tpu_custom_call.1} parent=11 // pred_fallthru
        _
      // Predicated region
      $region29: #{tpu_custom_call.1} parent=11 // pred_check
        %p196 = pneg %p143
      $region30: #{tpu_custom_call.1} parent=11 // pred_check_branch
        %198 = sbr.rel (%p196) target = $region32
      $region31: #{tpu_custom_call.1} parent=11 // pred_region
        _
      $region32: #{tpu_custom_call.1} parent=11 // pred_fallthru
        _
    $region12: #{tpu_custom_call.1} parent=5 // pred_fallthru
      _
    %p199 = scmp.lt.s32.totalorder %s12, 2
    // Predicated region
    $region33: #{tpu_custom_call.1} parent=5 // pred_check
      %p200 = pneg %p199
    $region34: #{tpu_custom_call.1} parent=5 // pred_check_branch
      %202 = sbr.rel (%p200) target = $region36
    $region35: #{tpu_custom_call.1} parent=5 // pred_region
      // Predicated region
      $region37: #{tpu_custom_call.1} parent=35 // pred_check
        %p203 = pneg %p32
      $region38: #{tpu_custom_call.1} parent=35 // pred_check_branch
        %205 = sbr.rel (%p203) target = $region40
      $region39: #{tpu_custom_call.1} parent=35 // pred_region
        %s206 = smul.u32 64, %s12
        %p207 = scmp.lt.s32.totalorder %s206, 127
        %s208 = scalar_select %p207, %s206, 127
        %s209 = smul.addr %s208, 8
        %s210 = scalar_lea.vmem %s0, %s209
        %s211 = smul.u32 64, %s12
      $region40: #{tpu_custom_call.1} parent=35 // pred_fallthru
        _
    $region36: #{tpu_custom_call.1} parent=5 // pred_fallthru
      _
    %p212 = scmp.le.s32.totalorder 1, %s12
    %p213 = scmp.lt.s32.totalorder %s12, 3
    %p214 = pnand %p212, %p213
    %p215 = pneg %p214
    // Predicated region
    $region41: #{tpu_custom_call.1} parent=5 // pred_check
      _
    $region42: #{tpu_custom_call.1} parent=5 // pred_check_branch
      %217 = sbr.rel (%p214) target = $region44
    $region43: #{tpu_custom_call.1} parent=5 // pred_region
      %s218 = ssub.s32 %s12, 1
      %s219 = smul.u32 64, %s17
      %p220 = scmp.lt.s32.totalorder %s219, 127
      %s221 = scalar_select %p220, %s219, 127
      %s222 = smul.addr %s221, 8
      %s223 = scalar_lea.vmem %s0, %s222
      %p224 = pneg %p38
      %p225 = pneg %p35
      %p226 = pneg %p59
      %p227 = pneg %p56
      %p228 = pneg %p80
      %p229 = pneg %p77
      %p230 = pneg %p101
      %p231 = pneg %p98
      %p232 = pneg %p122
      %p233 = pneg %p119
      %p234 = pneg %p143
      %p235 = pneg %p140
      %p236 = pneg %p169
      %p237 = pneg %p166
      %s238 = smul.u32 8, %s17
      %p239 = scmp.lt.s32.totalorder %s238, 15
      %s240 = scalar_select %p239, %s238, 15
      %s241 = smul.addr %s240, 8
      %s242 = scalar_lea.vmem %s6, %s241
      %s243 = smul.u32 64, %s17
      %p244 = scmp.lt.s32.totalorder %s243, 127
      %s245 = scalar_select %p244, %s243, 127
      %s246 = smul.addr %s245, 8
      %s247 = scalar_lea.vmem %s0, %s246
      %s248 = smul.u32 64, %s17
      %s249 = smul.u32 8, %s17
      %p250 = scmp.lt.s32.totalorder %s249, 15
      %s251 = scalar_select %p250, %s249, 15
      %s252 = smul.addr %s251, 8
      %s253 = scalar_lea.vmem %s6, %s252
      %s254 = smul.u32 8, %s17
      loop: start=0, step=1, limit=8
      $region45: #{tpu_custom_call.1} parent=43 // loop_pre_header
        _
      $region46: #{tpu_custom_call.1} parent=43 // loop_header
        %s256 = sphi 0, %s260
        %p257 = scmp.ge.s32.totalorder %s256, 8
      $region47: #{tpu_custom_call.1} parent=43 // loop_header_branch
        %259 = sbr.rel (%p257) target = $region51
      $region48: #{tpu_custom_call.1} parent=43 // loop_body
        %s261 = smul.u32 %s256, 64
        %s262 = scalar_lea.vmem %s247, %s261
        %v263 = vld [vmem:[%s262] sm:$0xff]
        %v264 = vld [vmem:[%s262 + $0x8] sm:$0xff]
        %v265 = vld [vmem:[%s262 + $0x10] sm:$0xff]
        %v266 = vld [vmem:[%s262 + $0x18] sm:$0xff]
        %v267 = vld [vmem:[%s262 + $0x20] sm:$0xff]
        %v268 = vld [vmem:[%s262 + $0x28] sm:$0xff]
        %v269 = vld [vmem:[%s262 + $0x30] sm:$0xff]
        %v270 = vld [vmem:[%s262 + $0x38] sm:$0xff]
        %vm271 = vcmask 261120
        %v272 = vsel %vm271, %v263, -inf
        %v273 = vrot.slane %v272, 4
        %v274 = vmax.f32 %v272, %v273
        %v275 = vrot.slane %v274, 2
        %v276 = vmax.f32 %v274, %v275
        %v277 = vrot.slane %v276, 1
        %v278 = vmax.f32 %v276, %v277
        %v279 = vsel %vm271, %v264, -inf
        %v280 = vrot.slane %v279, 4
        %v281 = vmax.f32 %v279, %v280
        %v282 = vrot.slane %v281, 2
        %v283 = vmax.f32 %v281, %v282
        %v284 = vrot.slane %v283, 1
        %v285 = vmax.f32 %v283, %v284
        %v286 = vsel %vm271, %v265, -inf
        %v287 = vrot.slane %v286, 4
        %v288 = vmax.f32 %v286, %v287
        %v289 = vrot.slane %v288, 2
        %v290 = vmax.f32 %v288, %v289
        %v291 = vrot.slane %v290, 1
        %v292 = vmax.f32 %v290, %v291
        %v293 = vsel %vm271, %v266, -inf
        %v294 = vrot.slane %v293, 4
        %v295 = vmax.f32 %v293, %v294
        %v296 = vrot.slane %v295, 2
        %v297 = vmax.f32 %v295, %v296
        %v298 = vrot.slane %v297, 1
        %v299 = vmax.f32 %v297, %v298
        %v300 = vsel %vm271, %v267, -inf
        %v301 = vrot.slane %v300, 4
        %v302 = vmax.f32 %v300, %v301
        %v303 = vrot.slane %v302, 2
        %v304 = vmax.f32 %v302, %v303
        %v305 = vrot.slane %v304, 1
        %v306 = vmax.f32 %v304, %v305
        %v307 = vsel %vm271, %v268, -inf
        %v308 = vrot.slane %v307, 4
        %v309 = vmax.f32 %v307, %v308
        %v310 = vrot.slane %v309, 2
        %v311 = vmax.f32 %v309, %v310
        %v312 = vrot.slane %v311, 1
        %v313 = vmax.f32 %v311, %v312
        %v314 = vsel %vm271, %v269, -inf
        %v315 = vrot.slane %v314, 4
        %v316 = vmax.f32 %v314, %v315
        %v317 = vrot.slane %v316, 2
        %v318 = vmax.f32 %v316, %v317
        %v319 = vrot.slane %v318, 1
        %v320 = vmax.f32 %v318, %v319
        %v321 = vsel %vm271, %v270, -inf
        %v322 = vrot.slane %v321, 4
        %v323 = vmax.f32 %v321, %v322
        %v324 = vrot.slane %v323, 2
        %v325 = vmax.f32 %v323, %v324
        %v326 = vrot.slane %v325, 1
        %v327 = vmax.f32 %v325, %v326
        %v328 = vld [vmem:[%s2] sm:$0xff]
        %v329 = vld [vmem:[%s2 + $0x8] sm:$0xff]
        %v330 = vld [vmem:[%s2 + $0x10] sm:$0xff]
        %v331 = vld [vmem:[%s2 + $0x18] sm:$0xff]
        %vm340 = vcmask 1041409
        %v341 = vsel %vm340, %v285, %v278
        %vm342 = vcmask 1042434
        %v343 = vsel %vm342, %v292, %v341
        %vm344 = vcmask 1043459
        %v345 = vsel %vm344, %v299, %v343
        %vm346 = vcmask 1044484
        %v347 = vsel %vm346, %v306, %v345
        %vm348 = vcmask 1045509
        %v349 = vsel %vm348, %v313, %v347
        %vm350 = vcmask 1046534
        %v351 = vsel %vm350, %v320, %v349
        %vm352 = vcmask 1047559
        %v353 = vsel %vm352, %v327, %v351
        %v354 = vsel %vm271, %v353, 0
        %356 = vmatprep.subr.mxu0 0.0
        %357 = vmatpush1.msra.mxu0 %v328
        %358 = vmatprep.subr.mxu0 0.0
        %359 = vmatpush1.msra.mxu0 %v329
        %360 = vmatprep.subr.mxu0 0.0
        %361 = vmatpush1.msra.mxu0 %v330
        %362 = vmatprep.subr.mxu0 0.0
        %363 = vmatpush1.msra.mxu0 %v331
        %364 = vmatprep.subr.mxu0 0.0
        %365 = vmatpush1.msra.mxu0 0.0
        %366 = vmatprep.subr.mxu0 0.0
        %367 = vmatpush1.msra.mxu0 0.0
        %368 = vmatprep.subr.mxu0 0.0
        %369 = vmatpush1.msra.mxu0 0.0
        %370 = vmatprep.subr.mxu0 0.0
        %371 = vmatpush1.msra.mxu0 0.0
        %372 = vmatprep.subr.mxu0 0.0
        %373 = vmatpush1.msra.mxu0 0.0
        %374 = vmatprep.subr.mxu0 0.0
        %375 = vmatpush1.msra.mxu0 0.0
        %376 = vmatprep.subr.mxu0 0.0
        %377 = vmatpush1.msra.mxu0 0.0
        %378 = vmatprep.subr.mxu0 0.0
        %379 = vmatpush1.msra.mxu0 0.0
        %380 = vmatprep.subr.mxu0 0.0
        %381 = vmatpush1.msra.mxu0 0.0
        %382 = vmatprep.subr.mxu0 0.0
        %383 = vmatpush1.msra.mxu0 0.0
        %384 = vmatprep.subr.mxu0 0.0
        %385 = vmatpush1.msra.mxu0 0.0
        %386 = vmatprep.subr.mxu0 0.0
        %387 = vmatpush1.msra.mxu0 0.0
        %388 = vmatprep.subr.mxu0 0.0
        %389 = vmatpush1.msra.mxu0 0.0
        %390 = vmatprep.subr.mxu0 0.0
        %391 = vmatpush1.msra.mxu0 0.0
        %392 = vmatprep.subr.mxu0 0.0
        %393 = vmatpush1.msra.mxu0 0.0
        %394 = vmatprep.subr.mxu0 0.0
        %395 = vmatpush1.msra.mxu0 0.0
        %396 = vmatprep.subr.mxu0 0.0
        %397 = vmatpush1.msra.mxu0 0.0
        %398 = vmatprep.subr.mxu0 0.0
        %399 = vmatpush1.msra.mxu0 0.0
        %400 = vmatprep.subr.mxu0 0.0
        %401 = vmatpush1.msra.mxu0 0.0
        %402 = vmatprep.subr.mxu0 0.0
        %403 = vmatpush1.msra.mxu0 0.0
        %404 = vmatprep.subr.mxu0 0.0
        %405 = vmatpush1.msra.mxu0 0.0
        %406 = vmatprep.subr.mxu0 0.0
        %407 = vmatpush1.msra.mxu0 0.0
        %408 = vmatprep.subr.mxu0 0.0
        %409 = vmatpush1.msra.mxu0 0.0
        %410 = vmatprep.subr.mxu0 0.0
        %411 = vmatpush1.msra.mxu0 0.0
        %412 = vmatprep.subr.mxu0 0.0
        %413 = vmatpush1.msra.mxu0 0.0
        %414 = vmatprep.subr.mxu0 0.0
        %415 = vmatpush1.msra.mxu0 0.0
        %416 = vmatprep.subr.mxu0 0.0
        %417 = vmatpush1.msra.mxu0 0.0
        %418 = vmatprep.subr.mxu0 0.0
        %419 = vmatpush1.msra.mxu0 0.0
        %420 = vmatprep.mubr.f32.mxu0 0.0
        %421 = vmatmul.mubr.f32.gmra.mrb[0].mxu0 %v354
        %v422 = vpop.f32.mrb[0].mxu0
        %v423 = vadd.f32 0.0, %v422
        %v424 = vpop.f32.mrb[0].mxu0
        %425 = vdwg.mxu0
        %427 = vrot.lane.b32.xlu0 %v423, 112
        %v428 = vpop.permute.xlu0 %427
        %429 = vrot.lane.b32.xlu0 %v423, 96
        %v430 = vpop.permute.xlu0 %429
        %431 = vrot.lane.b32.xlu0 %v423, 80
        %v432 = vpop.permute.xlu0 %431
        %433 = vrot.lane.b32.xlu0 %v423, 64
        %v434 = vpop.permute.xlu0 %433
        %435 = vrot.lane.b32.xlu0 %v423, 48
        %v436 = vpop.permute.xlu0 %435
        %437 = vrot.lane.b32.xlu0 %v423, 32
        %v438 = vpop.permute.xlu0 %437
        %439 = vrot.lane.b32.xlu0 %v423, 16
        %v440 = vpop.permute.xlu0 %439
        %v441 = vld [vmem:[%s1] sm:$0xff]
        %v442 = vld [vmem:[%s1 + $0x8] sm:$0xff]
        %v443 = vld [vmem:[%s1 + $0x10] sm:$0xff]
        %v444 = vld [vmem:[%s1 + $0x18] sm:$0xff]
        %v446 = vsel %vm271, %v263, 0
        %v449 = vsel %vm271, %v264, 0
        %v452 = vsel %vm271, %v265, 0
        %v455 = vsel %vm271, %v266, 0
        %v458 = vsel %vm271, %v267, 0
        %v461 = vsel %vm271, %v268, 0
        %v464 = vsel %vm271, %v269, 0
        %v467 = vsel %vm271, %v270, 0
        %469 = vmatprep.subr.mxu0 0.0
        %470 = vmatpush1.msra.mxu0 %v441
        %471 = vmatprep.subr.mxu0 0.0
        %472 = vmatpush1.msra.mxu0 %v442
        %473 = vmatprep.subr.mxu0 0.0
        %474 = vmatpush1.msra.mxu0 %v443
        %475 = vmatprep.subr.mxu0 0.0
        %476 = vmatpush1.msra.mxu0 %v444
        %477 = vmatprep.subr.mxu0 0.0
        %478 = vmatpush1.msra.mxu0 0.0
        %479 = vmatprep.subr.mxu0 0.0
        %480 = vmatpush1.msra.mxu0 0.0
        %481 = vmatprep.subr.mxu0 0.0
        %482 = vmatpush1.msra.mxu0 0.0
        %483 = vmatprep.subr.mxu0 0.0
        %484 = vmatpush1.msra.mxu0 0.0
        %485 = vmatprep.subr.mxu0 0.0
        %486 = vmatpush1.msra.mxu0 0.0
        %487 = vmatprep.subr.mxu0 0.0
        %488 = vmatpush1.msra.mxu0 0.0
        %489 = vmatprep.subr.mxu0 0.0
        %490 = vmatpush1.msra.mxu0 0.0
        %491 = vmatprep.subr.mxu0 0.0
        %492 = vmatpush1.msra.mxu0 0.0
        %493 = vmatprep.subr.mxu0 0.0
        %494 = vmatpush1.msra.mxu0 0.0
        %495 = vmatprep.subr.mxu0 0.0
        %496 = vmatpush1.msra.mxu0 0.0
        %497 = vmatprep.subr.mxu0 0.0
        %498 = vmatpush1.msra.mxu0 0.0
        %499 = vmatprep.subr.mxu0 0.0
        %500 = vmatpush1.msra.mxu0 0.0
        %501 = vmatprep.subr.mxu0 0.0
        %502 = vmatpush1.msra.mxu0 0.0
        %503 = vmatprep.subr.mxu0 0.0
        %504 = vmatpush1.msra.mxu0 0.0
        %505 = vmatprep.subr.mxu0 0.0
        %506 = vmatpush1.msra.mxu0 0.0
        %507 = vmatprep.subr.mxu0 0.0
        %508 = vmatpush1.msra.mxu0 0.0
        %509 = vmatprep.subr.mxu0 0.0
        %510 = vmatpush1.msra.mxu0 0.0
        %511 = vmatprep.subr.mxu0 0.0
        %512 = vmatpush1.msra.mxu0 0.0
        %513 = vmatprep.subr.mxu0 0.0
        %514 = vmatpush1.msra.mxu0 0.0
        %515 = vmatprep.subr.mxu0 0.0
        %516 = vmatpush1.msra.mxu0 0.0
        %517 = vmatprep.subr.mxu0 0.0
        %518 = vmatpush1.msra.mxu0 0.0
        %519 = vmatprep.subr.mxu0 0.0
        %520 = vmatpush1.msra.mxu0 0.0
        %521 = vmatprep.subr.mxu0 0.0
        %522 = vmatpush1.msra.mxu0 0.0
        %523 = vmatprep.subr.mxu0 0.0
        %524 = vmatpush1.msra.mxu0 0.0
        %525 = vmatprep.subr.mxu0 0.0
        %526 = vmatpush1.msra.mxu0 0.0
        %527 = vmatprep.subr.mxu0 0.0
        %528 = vmatpush1.msra.mxu0 0.0
        %529 = vmatprep.subr.mxu0 0.0
        %530 = vmatpush1.msra.mxu0 0.0
        %531 = vmatprep.subr.mxu0 0.0
        %532 = vmatpush1.msra.mxu0 0.0
        %533 = vmatprep.mubr.f32.mxu0 0.0
        %534 = vmatmul.mubr.f32.gmra.mrb[0].mxu0 %v446
        %v535 = vpop.f32.mrb[0].mxu0
        %v536 = vadd.f32 0.0, %v535
        %v537 = vpop.f32.mrb[0].mxu0
        %538 = vmatprep.mubr.f32.mxu0 0.0
        %539 = vmatmul.mubr.f32.gmra.mrb[0].mxu0 %v449
        %v540 = vpop.f32.mrb[0].mxu0
        %v541 = vadd.f32 0.0, %v540
        %v542 = vpop.f32.mrb[0].mxu0
        %543 = vmatprep.mubr.f32.mxu0 0.0
        %544 = vmatmul.mubr.f32.gmra.mrb[0].mxu0 %v452
        %v545 = vpop.f32.mrb[0].mxu0
        %v546 = vadd.f32 0.0, %v545
        %v547 = vpop.f32.mrb[0].mxu0
        %548 = vmatprep.mubr.f32.mxu0 0.0
        %549 = vmatmul.mubr.f32.gmra.mrb[0].mxu0 %v455
        %v550 = vpop.f32.mrb[0].mxu0
        %v551 = vadd.f32 0.0, %v550
        %v552 = vpop.f32.mrb[0].mxu0
        %553 = vmatprep.mubr.f32.mxu0 0.0
        %554 = vmatmul.mubr.f32.gmra.mrb[0].mxu0 %v458
        %v555 = vpop.f32.mrb[0].mxu0
        %v556 = vadd.f32 0.0, %v555
        %v557 = vpop.f32.mrb[0].mxu0
        %558 = vmatprep.mubr.f32.mxu0 0.0
        %559 = vmatmul.mubr.f32.gmra.mrb[0].mxu0 %v461
        %v560 = vpop.f32.mrb[0].mxu0
        %v561 = vadd.f32 0.0, %v560
        %v562 = vpop.f32.mrb[0].mxu0
        %563 = vmatprep.mubr.f32.mxu0 0.0
        %564 = vmatmul.mubr.f32.gmra.mrb[0].mxu0 %v464
        %v565 = vpop.f32.mrb[0].mxu0
        %v566 = vadd.f32 0.0, %v565
        %v567 = vpop.f32.mrb[0].mxu0
        %568 = vmatprep.mubr.f32.mxu0 0.0
        %569 = vmatmul.mubr.f32.gmra.mrb[0].mxu0 %v467
        %v570 = vpop.f32.mrb[0].mxu0
        %v571 = vadd.f32 0.0, %v570
        %v572 = vpop.f32.mrb[0].mxu0
        %573 = vdwg.mxu0
        %v574 = vld [vmem:[%s5] sm:$0xff]
        %v575 = vld [vmem:[%s5 + $0x8] sm:$0xff]
        %v576 = vld [vmem:[%s5 + $0x10] sm:$0xff]
        %v577 = vld [vmem:[%s5 + $0x18] sm:$0xff]
        %v578 = vld [vmem:[%s5 + $0x20] sm:$0xff]
        %v579 = vld [vmem:[%s5 + $0x28] sm:$0xff]
        %v580 = vld [vmem:[%s5 + $0x30] sm:$0xff]
        %v581 = vld [vmem:[%s5 + $0x38] sm:$0xff]
        %vm582 = vcmask 130048
        %v583 = vsel %vm582, %v423, 0
        %v585 = vsel %vm582, %v428, 0
        %v587 = vsel %vm582, %v430, 0
        %v589 = vsel %vm582, %v432, 0
        %v591 = vsel %vm582, %v434, 0
        %v593 = vsel %vm582, %v436, 0
        %v595 = vsel %vm582, %v438, 0
        %v597 = vsel %vm582, %v440, 0
        %v600 = vsel %vm582, %v536, 0
        %v603 = vsel %vm582, %v541, 0
        %v606 = vsel %vm582, %v546, 0
        %v609 = vsel %vm582, %v551, 0
        %v612 = vsel %vm582, %v556, 0
        %v615 = vsel %vm582, %v561, 0
        %v618 = vsel %vm582, %v566, 0
        %v621 = vsel %vm582, %v571, 0
        %623 = vmatprep.subr.mxu0 0.0
        %624 = vmatpush1.xpose.msra.mxu0 %v600
        %625 = vmatprep.subr.mxu0 0.0
        %626 = vmatpush1.xpose.msra.mxu0 %v603
        %627 = vmatprep.subr.mxu0 0.0
        %628 = vmatpush1.xpose.msra.mxu0 %v606
        %629 = vmatprep.subr.mxu0 0.0
        %630 = vmatpush1.xpose.msra.mxu0 %v609
        %631 = vmatprep.subr.mxu0 0.0
        %632 = vmatpush1.xpose.msra.mxu0 %v612
        %633 = vmatprep.subr.mxu0 0.0
        %634 = vmatpush1.xpose.msra.mxu0 %v615
        %635 = vmatprep.subr.mxu0 0.0
        %636 = vmatpush1.xpose.msra.mxu0 %v618
        %637 = vmatprep.subr.mxu0 0.0
        %638 = vmatpush1.xpose.msra.mxu0 %v621
        %639 = vmatprep.subr.mxu0 0.0
        %640 = vmatpush1.xpose.msra.mxu0 0.0
        %641 = vmatprep.subr.mxu0 0.0
        %642 = vmatpush1.xpose.msra.mxu0 0.0
        %643 = vmatprep.subr.mxu0 0.0
        %644 = vmatpush1.xpose.msra.mxu0 0.0
        %645 = vmatprep.subr.mxu0 0.0
        %646 = vmatpush1.xpose.msra.mxu0 0.0
        %647 = vmatprep.subr.mxu0 0.0
        %648 = vmatpush1.xpose.msra.mxu0 0.0
        %649 = vmatprep.subr.mxu0 0.0
        %650 = vmatpush1.xpose.msra.mxu0 0.0
        %651 = vmatprep.subr.mxu0 0.0
        %652 = vmatpush1.xpose.msra.mxu0 0.0
        %653 = vmatprep.subr.mxu0 0.0
        %654 = vmatpush1.xpose.msra.mxu0 0.0
        %655 = vmatprep.subr.mxu0 0.0
        %656 = vmatpush1.xpose.msra.mxu0 0.0
        %657 = vmatprep.subr.mxu0 0.0
        %658 = vmatpush1.xpose.msra.mxu0 0.0
        %659 = vmatprep.subr.mxu0 0.0
        %660 = vmatpush1.xpose.msra.mxu0 0.0
        %661 = vmatprep.subr.mxu0 0.0
        %662 = vmatpush1.xpose.msra.mxu0 0.0
        %663 = vmatprep.subr.mxu0 0.0
        %664 = vmatpush1.xpose.msra.mxu0 0.0
        %665 = vmatprep.subr.mxu0 0.0
        %666 = vmatpush1.xpose.msra.mxu0 0.0
        %667 = vmatprep.subr.mxu0 0.0
        %668 = vmatpush1.xpose.msra.mxu0 0.0
        %669 = vmatprep.subr.mxu0 0.0
        %670 = vmatpush1.xpose.msra.mxu0 0.0
        %671 = vmatprep.subr.mxu0 0.0
        %672 = vmatpush1.xpose.msra.mxu0 0.0
        %673 = vmatprep.subr.mxu0 0.0
        %674 = vmatpush1.xpose.msra.mxu0 0.0
        %675 = vmatprep.subr.mxu0 0.0
        %676 = vmatpush1.xpose.msra.mxu0 0.0
        %677 = vmatprep.subr.mxu0 0.0
        %678 = vmatpush1.xpose.msra.mxu0 0.0
        %679 = vmatprep.subr.mxu0 0.0
        %680 = vmatpush1.xpose.msra.mxu0 0.0
        %681 = vmatprep.subr.mxu0 0.0
        %682 = vmatpush1.xpose.msra.mxu0 0.0
        %683 = vmatprep.subr.mxu0 0.0
        %684 = vmatpush1.xpose.msra.mxu0 0.0
        %685 = vmatprep.subr.mxu0 0.0
        %686 = vmatpush1.xpose.msra.mxu0 0.0
        %687 = vmatprep.mubr.f32.mxu0 0.0
        %688 = vmatmul.mubr.f32.gmra.mrb[0].mxu0 %v583
        %v689 = vpop.f32.mrb[0].mxu0
        %v690 = vadd.f32 %v574, %v689
        %v691 = vpop.f32.mrb[0].mxu0
        %692 = vmatprep.mubr.f32.mxu0 0.0
        %693 = vmatmul.mubr.f32.gmra.mrb[0].mxu0 %v585
        %v694 = vpop.f32.mrb[0].mxu0
        %v695 = vadd.f32 %v575, %v694
        %v696 = vpop.f32.mrb[0].mxu0
        %697 = vmatprep.mubr.f32.mxu0 0.0
        %698 = vmatmul.mubr.f32.gmra.mrb[0].mxu0 %v587
        %v699 = vpop.f32.mrb[0].mxu0
        %v700 = vadd.f32 %v576, %v699
        %v701 = vpop.f32.mrb[0].mxu0
        %702 = vmatprep.mubr.f32.mxu0 0.0
        %703 = vmatmul.mubr.f32.gmra.mrb[0].mxu0 %v589
        %v704 = vpop.f32.mrb[0].mxu0
        %v705 = vadd.f32 %v577, %v704
        %v706 = vpop.f32.mrb[0].mxu0
        %707 = vmatprep.mubr.f32.mxu0 0.0
        %708 = vmatmul.mubr.f32.gmra.mrb[0].mxu0 %v591
        %v709 = vpop.f32.mrb[0].mxu0
        %v710 = vadd.f32 %v578, %v709
        %v711 = vpop.f32.mrb[0].mxu0
        %712 = vmatprep.mubr.f32.mxu0 0.0
        %713 = vmatmul.mubr.f32.gmra.mrb[0].mxu0 %v593
        %v714 = vpop.f32.mrb[0].mxu0
        %v715 = vadd.f32 %v579, %v714
        %v716 = vpop.f32.mrb[0].mxu0
        %717 = vmatprep.mubr.f32.mxu0 0.0
        %718 = vmatmul.mubr.f32.gmra.mrb[0].mxu0 %v595
        %v719 = vpop.f32.mrb[0].mxu0
        %v720 = vadd.f32 %v580, %v719
        %v721 = vpop.f32.mrb[0].mxu0
        %722 = vmatprep.mubr.f32.mxu0 0.0
        %723 = vmatmul.mubr.f32.gmra.mrb[0].mxu0 %v597
        %v724 = vpop.f32.mrb[0].mxu0
        %v725 = vadd.f32 %v581, %v724
        %v726 = vpop.f32.mrb[0].mxu0
        %727 = vdwg.mxu0
        %vm728 = vcmask 523264
        %v729 = vsel %vm728, %v690, -inf
        %730 = vmax.xlane.f32.xlu0 %v729
        %v731 = vpop.xlane.xlu0 %730
        %v732 = vsel %vm728, %v695, -inf
        %733 = vmax.xlane.f32.xlu0 %v732
        %v734 = vpop.xlane.xlu0 %733
        %v735 = vsel %vm728, %v700, -inf
        %736 = vmax.xlane.f32.xlu0 %v735
        %v737 = vpop.xlane.xlu0 %736
        %v738 = vsel %vm728, %v705, -inf
        %739 = vmax.xlane.f32.xlu0 %v738
        %v740 = vpop.xlane.xlu0 %739
        %v741 = vsel %vm728, %v710, -inf
        %742 = vmax.xlane.f32.xlu0 %v741
        %v743 = vpop.xlane.xlu0 %742
        %v744 = vsel %vm728, %v715, -inf
        %745 = vmax.xlane.f32.xlu0 %v744
        %v746 = vpop.xlane.xlu0 %745
        %v747 = vsel %vm728, %v720, -inf
        %748 = vmax.xlane.f32.xlu0 %v747
        %v749 = vpop.xlane.xlu0 %748
        %v750 = vsel %vm728, %v725, -inf
        %751 = vmax.xlane.f32.xlu0 %v750
        %v752 = vpop.xlane.xlu0 %751
        %v753 = vsub.f32 %v690, %v731
        %v754 = vsub.f32 %v695, %v734
        %v755 = vsub.f32 %v700, %v737
        %v756 = vsub.f32 %v705, %v740
        %v757 = vsub.f32 %v710, %v743
        %v758 = vsub.f32 %v715, %v746
        %v759 = vsub.f32 %v720, %v749
        %v760 = vsub.f32 %v725, %v752
        %v761 = vmul.f32 %v753, 1.442695
        %v762 = vpow.pop %v761
        %v763 = vmul.f32 %v754, 1.442695
        %v764 = vpow.pop %v763
        %v765 = vmul.f32 %v755, 1.442695
        %v766 = vpow.pop %v765
        %v767 = vmul.f32 %v756, 1.442695
        %v768 = vpow.pop %v767
        %v769 = vmul.f32 %v757, 1.442695
        %v770 = vpow.pop %v769
        %v771 = vmul.f32 %v758, 1.442695
        %v772 = vpow.pop %v771
        %v773 = vmul.f32 %v759, 1.442695
        %v774 = vpow.pop %v773
        %v775 = vmul.f32 %v760, 1.442695
        %v776 = vpow.pop %v775
        %v777 = vsel %vm728, %v762, 0.0
        %778 = vadd.xlane.f32.xlu0 %v777
        %v779 = vpop.xlane.xlu0 %778
        %v780 = vsel %vm728, %v764, 0.0
        %781 = vadd.xlane.f32.xlu0 %v780
        %v782 = vpop.xlane.xlu0 %781
        %v783 = vsel %vm728, %v766, 0.0
        %784 = vadd.xlane.f32.xlu0 %v783
        %v785 = vpop.xlane.xlu0 %784
        %v786 = vsel %vm728, %v768, 0.0
        %787 = vadd.xlane.f32.xlu0 %v786
        %v788 = vpop.xlane.xlu0 %787
        %v789 = vsel %vm728, %v770, 0.0
        %790 = vadd.xlane.f32.xlu0 %v789
        %v791 = vpop.xlane.xlu0 %790
        %v792 = vsel %vm728, %v772, 0.0
        %793 = vadd.xlane.f32.xlu0 %v792
        %v794 = vpop.xlane.xlu0 %793
        %v795 = vsel %vm728, %v774, 0.0
        %796 = vadd.xlane.f32.xlu0 %v795
        %v797 = vpop.xlane.xlu0 %796
        %v798 = vsel %vm728, %v776, 0.0
        %799 = vadd.xlane.f32.xlu0 %v798
        %v800 = vpop.xlane.xlu0 %799
        %v801 = vrcp.pop %v779
        %v802 = vmul.f32 %v762, %v801
        %v803 = vrcp.pop %v782
        %v804 = vmul.f32 %v764, %v803
        %v805 = vrcp.pop %v785
        %v806 = vmul.f32 %v766, %v805
        %v807 = vrcp.pop %v788
        %v808 = vmul.f32 %v768, %v807
        %v809 = vrcp.pop %v791
        %v810 = vmul.f32 %v770, %v809
        %v811 = vrcp.pop %v794
        %v812 = vmul.f32 %v772, %v811
        %v813 = vrcp.pop %v797
        %v814 = vmul.f32 %v774, %v813
        %v815 = vrcp.pop %v800
        %v816 = vmul.f32 %v776, %v815
        %v818 = vsel %vm728, %v802, 0
        %v821 = vsel %vm728, %v804, 0
        %v824 = vsel %vm728, %v806, 0
        %v827 = vsel %vm728, %v808, 0
        %v830 = vsel %vm728, %v810, 0
        %v833 = vsel %vm728, %v812, 0
        %v836 = vsel %vm728, %v814, 0
        %v839 = vsel %vm728, %v816, 0
        %841 = vmatprep.subr.mxu0 0.0
        %842 = vmatpush1.msra.mxu0 %v263
        %843 = vmatprep.subr.mxu0 0.0
        %844 = vmatpush1.msra.mxu0 %v264
        %845 = vmatprep.subr.mxu0 0.0
        %846 = vmatpush1.msra.mxu0 %v265
        %847 = vmatprep.subr.mxu0 0.0
        %848 = vmatpush1.msra.mxu0 %v266
        %849 = vmatprep.subr.mxu0 0.0
        %850 = vmatpush1.msra.mxu0 %v267
        %851 = vmatprep.subr.mxu0 0.0
        %852 = vmatpush1.msra.mxu0 %v268
        %853 = vmatprep.subr.mxu0 0.0
        %854 = vmatpush1.msra.mxu0 %v269
        %855 = vmatprep.subr.mxu0 0.0
        %856 = vmatpush1.msra.mxu0 %v270
        %857 = vmatprep.subr.mxu0 0.0
        %858 = vmatpush1.msra.mxu0 0.0
        %859 = vmatprep.subr.mxu0 0.0
        %860 = vmatpush1.msra.mxu0 0.0
        %861 = vmatprep.subr.mxu0 0.0
        %862 = vmatpush1.msra.mxu0 0.0
        %863 = vmatprep.subr.mxu0 0.0
        %864 = vmatpush1.msra.mxu0 0.0
        %865 = vmatprep.subr.mxu0 0.0
        %866 = vmatpush1.msra.mxu0 0.0
        %867 = vmatprep.subr.mxu0 0.0
        %868 = vmatpush1.msra.mxu0 0.0
        %869 = vmatprep.subr.mxu0 0.0
        %870 = vmatpush1.msra.mxu0 0.0
        %871 = vmatprep.subr.mxu0 0.0
        %872 = vmatpush1.msra.mxu0 0.0
        %873 = vmatprep.subr.mxu0 0.0
        %874 = vmatpush1.msra.mxu0 0.0
        %875 = vmatprep.subr.mxu0 0.0
        %876 = vmatpush1.msra.mxu0 0.0
        %877 = vmatprep.subr.mxu0 0.0
        %878 = vmatpush1.msra.mxu0 0.0
        %879 = vmatprep.subr.mxu0 0.0
        %880 = vmatpush1.msra.mxu0 0.0
        %881 = vmatprep.subr.mxu0 0.0
        %882 = vmatpush1.msra.mxu0 0.0
        %883 = vmatprep.subr.mxu0 0.0
        %884 = vmatpush1.msra.mxu0 0.0
        %885 = vmatprep.subr.mxu0 0.0
        %886 = vmatpush1.msra.mxu0 0.0
        %887 = vmatprep.subr.mxu0 0.0
        %888 = vmatpush1.msra.mxu0 0.0
        %889 = vmatprep.subr.mxu0 0.0
        %890 = vmatpush1.msra.mxu0 0.0
        %891 = vmatprep.subr.mxu0 0.0
        %892 = vmatpush1.msra.mxu0 0.0
        %893 = vmatprep.subr.mxu0 0.0
        %894 = vmatpush1.msra.mxu0 0.0
        %895 = vmatprep.subr.mxu0 0.0
        %896 = vmatpush1.msra.mxu0 0.0
        %897 = vmatprep.subr.mxu0 0.0
        %898 = vmatpush1.msra.mxu0 0.0
        %899 = vmatprep.subr.mxu0 0.0
        %900 = vmatpush1.msra.mxu0 0.0
        %901 = vmatprep.subr.mxu0 0.0
        %902 = vmatpush1.msra.mxu0 0.0
        %903 = vmatprep.subr.mxu0 0.0
        %904 = vmatpush1.msra.mxu0 0.0
        %905 = vmatprep.mubr.f32.mxu0 0.0
        %906 = vmatmul.mubr.f32.gmra.mrb[0].mxu0 %v818
        %v907 = vpop.f32.mrb[0].mxu0
        %v908 = vadd.f32 0.0, %v907
        %v909 = vpop.f32.mrb[0].mxu0
        %910 = vmatprep.mubr.f32.mxu0 0.0
        %911 = vmatmul.mubr.f32.gmra.mrb[0].mxu0 %v821
        %v912 = vpop.f32.mrb[0].mxu0
        %v913 = vadd.f32 0.0, %v912
        %v914 = vpop.f32.mrb[0].mxu0
        %915 = vmatprep.mubr.f32.mxu0 0.0
        %916 = vmatmul.mubr.f32.gmra.mrb[0].mxu0 %v824
        %v917 = vpop.f32.mrb[0].mxu0
        %v918 = vadd.f32 0.0, %v917
        %v919 = vpop.f32.mrb[0].mxu0
        %920 = vmatprep.mubr.f32.mxu0 0.0
        %921 = vmatmul.mubr.f32.gmra.mrb[0].mxu0 %v827
        %v922 = vpop.f32.mrb[0].mxu0
        %v923 = vadd.f32 0.0, %v922
        %v924 = vpop.f32.mrb[0].mxu0
        %925 = vmatprep.mubr.f32.mxu0 0.0
        %926 = vmatmul.mubr.f32.gmra.mrb[0].mxu0 %v830
        %v927 = vpop.f32.mrb[0].mxu0
        %v928 = vadd.f32 0.0, %v927
        %v929 = vpop.f32.mrb[0].mxu0
        %930 = vmatprep.mubr.f32.mxu0 0.0
        %931 = vmatmul.mubr.f32.gmra.mrb[0].mxu0 %v833
        %v932 = vpop.f32.mrb[0].mxu0
        %v933 = vadd.f32 0.0, %v932
        %v934 = vpop.f32.mrb[0].mxu0
        %935 = vmatprep.mubr.f32.mxu0 0.0
        %936 = vmatmul.mubr.f32.gmra.mrb[0].mxu0 %v836
        %v937 = vpop.f32.mrb[0].mxu0
        %v938 = vadd.f32 0.0, %v937
        %v939 = vpop.f32.mrb[0].mxu0
        %940 = vmatprep.mubr.f32.mxu0 0.0
        %941 = vmatmul.mubr.f32.gmra.mrb[0].mxu0 %v839
        %v942 = vpop.f32.mrb[0].mxu0
        %v943 = vadd.f32 0.0, %v942
        %v944 = vpop.f32.mrb[0].mxu0
        %945 = vdwg.mxu0
        %v946 = vsub.f32 %v908, %v928
        %v947 = vsub.f32 %v913, %v933
        %v948 = vsub.f32 %v918, %v938
        %v949 = vsub.f32 %v923, %v943
        %v950 = vld [vmem:[%s3] sm:$0xff]
        %v951 = vld [vmem:[%s3 + $0x8] sm:$0xff]
        %v952 = vld [vmem:[%s3 + $0x10] sm:$0xff]
        %v953 = vld [vmem:[%s3 + $0x18] sm:$0xff]
        %s954 = scalar_lea.vmem %s3, 32
        %v955 = vld [vmem:[%s954] sm:$0xff]
        %v956 = vld [vmem:[%s954 + $0x8] sm:$0xff]
        %v957 = vld [vmem:[%s954 + $0x10] sm:$0xff]
        %v958 = vld [vmem:[%s954 + $0x18] sm:$0xff]
        %v960 = vsel %vm271, %v947, 0
        %962 = vmatprep.subr.mxu0 0.0
        %963 = vmatpush1.msra.mxu0 %v955
        %964 = vmatprep.subr.mxu0 0.0
        %965 = vmatpush1.msra.mxu0 %v956
        %966 = vmatprep.subr.mxu0 0.0
        %967 = vmatpush1.msra.mxu0 %v957
        %968 = vmatprep.subr.mxu0 0.0
        %969 = vmatpush1.msra.mxu0 %v958
        %970 = vmatprep.subr.mxu0 0.0
        %971 = vmatpush1.msra.mxu0 0.0
        %972 = vmatprep.subr.mxu0 0.0
        %973 = vmatpush1.msra.mxu0 0.0
        %974 = vmatprep.subr.mxu0 0.0
        %975 = vmatpush1.msra.mxu0 0.0
        %976 = vmatprep.subr.mxu0 0.0
        %977 = vmatpush1.msra.mxu0 0.0
        %978 = vmatprep.subr.mxu0 0.0
        %979 = vmatpush1.msra.mxu0 0.0
        %980 = vmatprep.subr.mxu0 0.0
        %981 = vmatpush1.msra.mxu0 0.0
        %982 = vmatprep.subr.mxu0 0.0
        %983 = vmatpush1.msra.mxu0 0.0
        %984 = vmatprep.subr.mxu0 0.0
        %985 = vmatpush1.msra.mxu0 0.0
        %986 = vmatprep.subr.mxu0 0.0
        %987 = vmatpush1.msra.mxu0 0.0
        %988 = vmatprep.subr.mxu0 0.0
        %989 = vmatpush1.msra.mxu0 0.0
        %990 = vmatprep.subr.mxu0 0.0
        %991 = vmatpush1.msra.mxu0 0.0
        %992 = vmatprep.subr.mxu0 0.0
        %993 = vmatpush1.msra.mxu0 0.0
        %994 = vmatprep.subr.mxu0 0.0
        %995 = vmatpush1.msra.mxu0 0.0
        %996 = vmatprep.subr.mxu0 0.0
        %997 = vmatpush1.msra.mxu0 0.0
        %998 = vmatprep.subr.mxu0 0.0
        %999 = vmatpush1.msra.mxu0 0.0
        %1000 = vmatprep.subr.mxu0 0.0
        %1001 = vmatpush1.msra.mxu0 0.0
        %1002 = vmatprep.subr.mxu0 0.0
        %1003 = vmatpush1.msra.mxu0 0.0
        %1004 = vmatprep.subr.mxu0 0.0
        %1005 = vmatpush1.msra.mxu0 0.0
        %1006 = vmatprep.subr.mxu0 0.0
        %1007 = vmatpush1.msra.mxu0 0.0
        %1008 = vmatprep.subr.mxu0 0.0
        %1009 = vmatpush1.msra.mxu0 0.0
        %1010 = vmatprep.subr.mxu0 0.0
        %1011 = vmatpush1.msra.mxu0 0.0
        %1012 = vmatprep.subr.mxu0 0.0
        %1013 = vmatpush1.msra.mxu0 0.0
        %1014 = vmatprep.subr.mxu0 0.0
        %1015 = vmatpush1.msra.mxu0 0.0
        %1016 = vmatprep.subr.mxu0 0.0
        %1017 = vmatpush1.msra.mxu0 0.0
        %1018 = vmatprep.subr.mxu0 0.0
        %1019 = vmatpush1.msra.mxu0 0.0
        %1020 = vmatprep.subr.mxu0 0.0
        %1021 = vmatpush1.msra.mxu0 0.0
        %1022 = vmatprep.subr.mxu0 0.0
        %1023 = vmatpush1.msra.mxu0 0.0
        %1024 = vmatprep.subr.mxu0 0.0
        %1025 = vmatpush1.msra.mxu0 0.0
        %1026 = vmatprep.mubr.f32.mxu0 0.0
        %1027 = vmatmul.mubr.f32.gmra.mrb[0].mxu0 %v960
        %v1028 = vpop.f32.mrb[0].mxu0
        %v1029 = vadd.f32 0.0, %v1028
        %v1030 = vpop.f32.mrb[0].mxu0
        %1031 = vdwg.mxu0
        %v1033 = vsel %vm271, %v946, 0
        %1035 = vmatprep.subr.mxu0 0.0
        %1036 = vmatpush1.msra.mxu0 %v950
        %1037 = vmatprep.subr.mxu0 0.0
        %1038 = vmatpush1.msra.mxu0 %v951
        %1039 = vmatprep.subr.mxu0 0.0
        %1040 = vmatpush1.msra.mxu0 %v952
        %1041 = vmatprep.subr.mxu0 0.0
        %1042 = vmatpush1.msra.mxu0 %v953
        %1043 = vmatprep.subr.mxu0 0.0
        %1044 = vmatpush1.msra.mxu0 0.0
        %1045 = vmatprep.subr.mxu0 0.0
        %1046 = vmatpush1.msra.mxu0 0.0
        %1047 = vmatprep.subr.mxu0 0.0
        %1048 = vmatpush1.msra.mxu0 0.0
        %1049 = vmatprep.subr.mxu0 0.0
        %1050 = vmatpush1.msra.mxu0 0.0
        %1051 = vmatprep.subr.mxu0 0.0
        %1052 = vmatpush1.msra.mxu0 0.0
        %1053 = vmatprep.subr.mxu0 0.0
        %1054 = vmatpush1.msra.mxu0 0.0
        %1055 = vmatprep.subr.mxu0 0.0
        %1056 = vmatpush1.msra.mxu0 0.0
        %1057 = vmatprep.subr.mxu0 0.0
        %1058 = vmatpush1.msra.mxu0 0.0
        %1059 = vmatprep.subr.mxu0 0.0
        %1060 = vmatpush1.msra.mxu0 0.0
        %1061 = vmatprep.subr.mxu0 0.0
        %1062 = vmatpush1.msra.mxu0 0.0
        %1063 = vmatprep.subr.mxu0 0.0
        %1064 = vmatpush1.msra.mxu0 0.0
        %1065 = vmatprep.subr.mxu0 0.0
        %1066 = vmatpush1.msra.mxu0 0.0
        %1067 = vmatprep.subr.mxu0 0.0
        %1068 = vmatpush1.msra.mxu0 0.0
        %1069 = vmatprep.subr.mxu0 0.0
        %1070 = vmatpush1.msra.mxu0 0.0
        %1071 = vmatprep.subr.mxu0 0.0
        %1072 = vmatpush1.msra.mxu0 0.0
        %1073 = vmatprep.subr.mxu0 0.0
        %1074 = vmatpush1.msra.mxu0 0.0
        %1075 = vmatprep.subr.mxu0 0.0
        %1076 = vmatpush1.msra.mxu0 0.0
        %1077 = vmatprep.subr.mxu0 0.0
        %1078 = vmatpush1.msra.mxu0 0.0
        %1079 = vmatprep.subr.mxu0 0.0
        %1080 = vmatpush1.msra.mxu0 0.0
        %1081 = vmatprep.subr.mxu0 0.0
        %1082 = vmatpush1.msra.mxu0 0.0
        %1083 = vmatprep.subr.mxu0 0.0
        %1084 = vmatpush1.msra.mxu0 0.0
        %1085 = vmatprep.subr.mxu0 0.0
        %1086 = vmatpush1.msra.mxu0 0.0
        %1087 = vmatprep.subr.mxu0 0.0
        %1088 = vmatpush1.msra.mxu0 0.0
        %1089 = vmatprep.subr.mxu0 0.0
        %1090 = vmatpush1.msra.mxu0 0.0
        %1091 = vmatprep.subr.mxu0 0.0
        %1092 = vmatpush1.msra.mxu0 0.0
        %1093 = vmatprep.subr.mxu0 0.0
        %1094 = vmatpush1.msra.mxu0 0.0
        %1095 = vmatprep.subr.mxu0 0.0
        %1096 = vmatpush1.msra.mxu0 0.0
        %1097 = vmatprep.subr.mxu0 0.0
        %1098 = vmatpush1.msra.mxu0 0.0
        %1099 = vmatprep.mubr.f32.mxu0 0.0
        %1100 = vmatmul.mubr.f32.gmra.mrb[0].mxu0 %v1033
        %v1101 = vpop.f32.mrb[0].mxu0
        %v1102 = vadd.f32 %v1029, %v1101
        %v1103 = vpop.f32.mrb[0].mxu0
        %1104 = vdwg.mxu0
        %s1105 = scalar_lea.vmem %s3, 64
        %v1106 = vld [vmem:[%s1105] sm:$0xff]
        %v1107 = vld [vmem:[%s1105 + $0x8] sm:$0xff]
        %v1108 = vld [vmem:[%s1105 + $0x10] sm:$0xff]
        %v1109 = vld [vmem:[%s1105 + $0x18] sm:$0xff]
        %v1111 = vsel %vm271, %v948, 0
        %1113 = vmatprep.subr.mxu0 0.0
        %1114 = vmatpush1.msra.mxu0 %v1106
        %1115 = vmatprep.subr.mxu0 0.0
        %1116 = vmatpush1.msra.mxu0 %v1107
        %1117 = vmatprep.subr.mxu0 0.0
        %1118 = vmatpush1.msra.mxu0 %v1108
        %1119 = vmatprep.subr.mxu0 0.0
        %1120 = vmatpush1.msra.mxu0 %v1109
        %1121 = vmatprep.subr.mxu0 0.0
        %1122 = vmatpush1.msra.mxu0 0.0
        %1123 = vmatprep.subr.mxu0 0.0
        %1124 = vmatpush1.msra.mxu0 0.0
        %1125 = vmatprep.subr.mxu0 0.0
        %1126 = vmatpush1.msra.mxu0 0.0
        %1127 = vmatprep.subr.mxu0 0.0
        %1128 = vmatpush1.msra.mxu0 0.0
        %1129 = vmatprep.subr.mxu0 0.0
        %1130 = vmatpush1.msra.mxu0 0.0
        %1131 = vmatprep.subr.mxu0 0.0
        %1132 = vmatpush1.msra.mxu0 0.0
        %1133 = vmatprep.subr.mxu0 0.0
        %1134 = vmatpush1.msra.mxu0 0.0
        %1135 = vmatprep.subr.mxu0 0.0
        %1136 = vmatpush1.msra.mxu0 0.0
        %1137 = vmatprep.subr.mxu0 0.0
        %1138 = vmatpush1.msra.mxu0 0.0
        %1139 = vmatprep.subr.mxu0 0.0
        %1140 = vmatpush1.msra.mxu0 0.0
        %1141 = vmatprep.subr.mxu0 0.0
        %1142 = vmatpush1.msra.mxu0 0.0
        %1143 = vmatprep.subr.mxu0 0.0
        %1144 = vmatpush1.msra.mxu0 0.0
        %1145 = vmatprep.subr.mxu0 0.0
        %1146 = vmatpush1.msra.mxu0 0.0
        %1147 = vmatprep.subr.mxu0 0.0
        %1148 = vmatpush1.msra.mxu0 0.0
        %1149 = vmatprep.subr.mxu0 0.0
        %1150 = vmatpush1.msra.mxu0 0.0
        %1151 = vmatprep.subr.mxu0 0.0
        %1152 = vmatpush1.msra.mxu0 0.0
        %1153 = vmatprep.subr.mxu0 0.0
        %1154 = vmatpush1.msra.mxu0 0.0
        %1155 = vmatprep.subr.mxu0 0.0
        %1156 = vmatpush1.msra.mxu0 0.0
        %1157 = vmatprep.subr.mxu0 0.0
        %1158 = vmatpush1.msra.mxu0 0.0
        %1159 = vmatprep.subr.mxu0 0.0
        %1160 = vmatpush1.msra.mxu0 0.0
        %1161 = vmatprep.subr.mxu0 0.0
        %1162 = vmatpush1.msra.mxu0 0.0
        %1163 = vmatprep.subr.mxu0 0.0
        %1164 = vmatpush1.msra.mxu0 0.0
        %1165 = vmatprep.subr.mxu0 0.0
        %1166 = vmatpush1.msra.mxu0 0.0
        %1167 = vmatprep.subr.mxu0 0.0
        %1168 = vmatpush1.msra.mxu0 0.0
        %1169 = vmatprep.subr.mxu0 0.0
        %1170 = vmatpush1.msra.mxu0 0.0
        %1171 = vmatprep.subr.mxu0 0.0
        %1172 = vmatpush1.msra.mxu0 0.0
        %1173 = vmatprep.subr.mxu0 0.0
        %1174 = vmatpush1.msra.mxu0 0.0
        %1175 = vmatprep.subr.mxu0 0.0
        %1176 = vmatpush1.msra.mxu0 0.0
        %1177 = vmatprep.mubr.f32.mxu0 0.0
        %1178 = vmatmul.mubr.f32.gmra.mrb[0].mxu0 %v1111
        %v1179 = vpop.f32.mrb[0].mxu0
        %v1180 = vadd.f32 0.0, %v1179
        %v1181 = vpop.f32.mrb[0].mxu0
        %1182 = vdwg.mxu0
        %v1183 = vadd.f32 %v1102, %v1180
        %s1184 = scalar_lea.vmem %s3, 96
        %v1185 = vld [vmem:[%s1184] sm:$0xff]
        %v1186 = vld [vmem:[%s1184 + $0x8] sm:$0xff]
        %v1187 = vld [vmem:[%s1184 + $0x10] sm:$0xff]
        %v1188 = vld [vmem:[%s1184 + $0x18] sm:$0xff]
        %v1190 = vsel %vm271, %v949, 0
        %1192 = vmatprep.subr.mxu0 0.0
        %1193 = vmatpush1.msra.mxu0 %v1185
        %1194 = vmatprep.subr.mxu0 0.0
        %1195 = vmatpush1.msra.mxu0 %v1186
        %1196 = vmatprep.subr.mxu0 0.0
        %1197 = vmatpush1.msra.mxu0 %v1187
        %1198 = vmatprep.subr.mxu0 0.0
        %1199 = vmatpush1.msra.mxu0 %v1188
        %1200 = vmatprep.subr.mxu0 0.0
        %1201 = vmatpush1.msra.mxu0 0.0
        %1202 = vmatprep.subr.mxu0 0.0
        %1203 = vmatpush1.msra.mxu0 0.0
        %1204 = vmatprep.subr.mxu0 0.0
        %1205 = vmatpush1.msra.mxu0 0.0
        %1206 = vmatprep.subr.mxu0 0.0
        %1207 = vmatpush1.msra.mxu0 0.0
        %1208 = vmatprep.subr.mxu0 0.0
        %1209 = vmatpush1.msra.mxu0 0.0
        %1210 = vmatprep.subr.mxu0 0.0
        %1211 = vmatpush1.msra.mxu0 0.0
        %1212 = vmatprep.subr.mxu0 0.0
        %1213 = vmatpush1.msra.mxu0 0.0
        %1214 = vmatprep.subr.mxu0 0.0
        %1215 = vmatpush1.msra.mxu0 0.0
        %1216 = vmatprep.subr.mxu0 0.0
        %1217 = vmatpush1.msra.mxu0 0.0
        %1218 = vmatprep.subr.mxu0 0.0
        %1219 = vmatpush1.msra.mxu0 0.0
        %1220 = vmatprep.subr.mxu0 0.0
        %1221 = vmatpush1.msra.mxu0 0.0
        %1222 = vmatprep.subr.mxu0 0.0
        %1223 = vmatpush1.msra.mxu0 0.0
        %1224 = vmatprep.subr.mxu0 0.0
        %1225 = vmatpush1.msra.mxu0 0.0
        %1226 = vmatprep.subr.mxu0 0.0
        %1227 = vmatpush1.msra.mxu0 0.0
        %1228 = vmatprep.subr.mxu0 0.0
        %1229 = vmatpush1.msra.mxu0 0.0
        %1230 = vmatprep.subr.mxu0 0.0
        %1231 = vmatpush1.msra.mxu0 0.0
        %1232 = vmatprep.subr.mxu0 0.0
        %1233 = vmatpush1.msra.mxu0 0.0
        %1234 = vmatprep.subr.mxu0 0.0
        %1235 = vmatpush1.msra.mxu0 0.0
        %1236 = vmatprep.subr.mxu0 0.0
        %1237 = vmatpush1.msra.mxu0 0.0
        %1238 = vmatprep.subr.mxu0 0.0
        %1239 = vmatpush1.msra.mxu0 0.0
        %1240 = vmatprep.subr.mxu0 0.0
        %1241 = vmatpush1.msra.mxu0 0.0
        %1242 = vmatprep.subr.mxu0 0.0
        %1243 = vmatpush1.msra.mxu0 0.0
        %1244 = vmatprep.subr.mxu0 0.0
        %1245 = vmatpush1.msra.mxu0 0.0
        %1246 = vmatprep.subr.mxu0 0.0
        %1247 = vmatpush1.msra.mxu0 0.0
        %1248 = vmatprep.subr.mxu0 0.0
        %1249 = vmatpush1.msra.mxu0 0.0
        %1250 = vmatprep.subr.mxu0 0.0
        %1251 = vmatpush1.msra.mxu0 0.0
        %1252 = vmatprep.subr.mxu0 0.0
        %1253 = vmatpush1.msra.mxu0 0.0
        %1254 = vmatprep.subr.mxu0 0.0
        %1255 = vmatpush1.msra.mxu0 0.0
        %1256 = vmatprep.mubr.f32.mxu0 0.0
        %1257 = vmatmul.mubr.f32.gmra.mrb[0].mxu0 %v1190
        %v1258 = vpop.f32.mrb[0].mxu0
        %v1259 = vadd.f32 0.0, %v1258
        %v1260 = vpop.f32.mrb[0].mxu0
        %1261 = vdwg.mxu0
        %v1262 = vadd.f32 %v1183, %v1259
        %v1263 = vld [vmem:[%s4] sm:$0x1]
        %v1265 = vlaneseq
        %v1266 = vshrl.u32 %v1265, 7
        %v1267 = vsub.s32 0, %v1266
        %v1268 = vrot.slane %v1263, %v1267
        %v1270 = vadd.f32 %v1262, %v1268
        %vm1271 = vcmp.ge.f32.partialorder %v1270, 0.0
        %v1272 = vmul.f32 %v1270, 0.01
        %v1273 = vsel %vm1271, %v1270, %v1272
        %s1274 = smul.u32 %s256, 8
        %s1275 = scalar_lea.vmem %s253, %s1274
        %1276 = vst.msk [vmem:[%s1275] sm:$0xff] %vm271, %v1273
      $region49: #{tpu_custom_call.1} parent=43 // loop_footer
        %s260 = sadd.s32 1, %s256
      $region50: #{tpu_custom_call.1} parent=43 // loop_footer_branch
        %255 = sbr.rel target = $region46
      $region51: #{tpu_custom_call.1} parent=43 // loop_exit
        _
      %s1277 = smul.u32 8, %s17
      %p1278 = scmp.lt.s32.totalorder %s1277, 15
      %s1279 = scalar_select %p1278, %s1277, 15
      %s1280 = smul.addr %s1279, 8
      %s1281 = scalar_lea.vmem %s6, %s1280
      // Predicated region
      $region52: #{tpu_custom_call.1} parent=43 // pred_check
        %p1282 = pneg %p166
      $region53: #{tpu_custom_call.1} parent=43 // pred_check_branch
        %1284 = sbr.rel (%p1282) target = $region55
      $region54: #{tpu_custom_call.1} parent=43 // pred_region
        %s1285 = smul.u32 8, %s17
      $region55: #{tpu_custom_call.1} parent=43 // pred_fallthru
        _
    $region44: #{tpu_custom_call.1} parent=5 // pred_fallthru
      _
    %p1286 = scmp.le.s32.totalorder 2, %s12
    // Predicated region
    $region56: #{tpu_custom_call.1} parent=5 // pred_check
      %p1287 = pneg %p1286
    $region57: #{tpu_custom_call.1} parent=5 // pred_check_branch
      %1289 = sbr.rel (%p1287) target = $region59
    $region58: #{tpu_custom_call.1} parent=5 // pred_region
      %s1290 = ssub.s32 %s12, 2
      // Predicated region
      $region60: #{tpu_custom_call.1} parent=58 // pred_check
        %p1291 = pneg %p172
      $region61: #{tpu_custom_call.1} parent=58 // pred_check_branch
        %1293 = sbr.rel (%p1291) target = $region63
      $region62: #{tpu_custom_call.1} parent=58 // pred_region
        %s1294 = smul.u32 8, %s18
        %p1295 = scmp.lt.s32.totalorder %s1294, 15
        %s1296 = scalar_select %p1295, %s1294, 15
        %s1297 = smul.addr %s1296, 8
        %s1298 = scalar_lea.vmem %s6, %s1297
      $region63: #{tpu_custom_call.1} parent=58 // pred_fallthru
        _
    $region59: #{tpu_custom_call.1} parent=5 // pred_fallthru
      _
  $region6: #{tpu_custom_call.1} parent=0 // loop_footer
    %s16 = sadd.s32 1, %s12
  $region7: #{tpu_custom_call.1} parent=0 // loop_footer_branch
    %11 = sbr.rel target = $region3
  $region8: #{tpu_custom_call.1} parent=0 // loop_exit
    _

</llo_original>
